<compile_context>
chip_gen: v5e
topology: v5e:2x2
jax: 0.10.0
libtpu: 0.0.40
codegen_flags: <defaults>
</compile_context>

<pallas_src>
import functools

import jax
import jax.numpy as jnp
from jax.experimental import pallas as pl
from jax.experimental.pallas import tpu as pltpu


# -----------------------------------------------------------------------------
# Kernel
# -----------------------------------------------------------------------------
def fm_kernel(x_ref, v_ref, coef_ref, b_ref, o_ref, *, chunk, num_chunks, precision):
    # x_ref   : (TILE_B, n)  compute dtype (bf16 or f32)   -- streamed per tile
    # v_ref   : (n, k)       compute dtype                 -- VMEM resident
    # coef_ref: (2, n)       f32: [w ; -0.5 * sum_k V^2]   -- VMEM resident
    # b_ref   : (1, 1)       f32 scalar in SMEM
    # o_ref   : (TILE_B, 1)  f32
    bias = b_ref[0, 0]

    def compute_rows(r0):
        x = x_ref[pl.ds(r0, chunk), :]                                  # (chunk, n)

        # Interaction "plus" term on the MXU, squared-sum over k in f32.
        xv = jnp.dot(x, v_ref[...], preferred_element_type=jnp.float32,
                     precision=precision)                               # (chunk, k)
        out_1 = jnp.sum(xv * xv, axis=1, keepdims=True)                 # (chunk, 1)

        # Linear term and the (exactly equivalent) -0.5 * x^2 @ sum_k(V^2) term,
        # fused into one VPU polynomial + lane reduce (no N=1 matmuls).
        coef = coef_ref[...]                                            # (2, n) f32
        w_row = coef[0:1, :]
        s_row = coef[1:2, :]                                            # -0.5 * sum_k V^2
        xf = x.astype(jnp.float32)
        rest = jnp.sum(xf * w_row + (xf * xf) * s_row, axis=1, keepdims=True)

        o_ref[pl.ds(r0, chunk), :] = (0.5 * out_1 + rest + bias).astype(o_ref.dtype)

    if num_chunks == 1:
        compute_rows(0)
    else:
        def body(c, carry):
            compute_rows(pl.multiple_of(c * chunk, chunk))
            return carry
        jax.lax.fori_loop(0, num_chunks, body, 0)


# -----------------------------------------------------------------------------
# Wrapper
# -----------------------------------------------------------------------------
def _round_up(v, m):
    return ((v + m - 1) // m) * m


def _round_down(v, m):
    return (v // m) * m


def _cdiv(a, b):
    return (a + b - 1) // b


def _vmem_capacity_bytes():
    try:
        return int(pltpu.get_tpu_info().vmem_capacity_bytes)
    except Exception:
        return 64 * 1024 * 1024          # conservative (v7x per-TensorCore)


def _maybe_buffered_spec(block_shape, index_map, depth):
    """BlockSpec with N-deep pipelining if supported; falls back to default."""
    if depth is None or depth <= 2:
        return pl.BlockSpec(block_shape, index_map)
    try:
        return pl.BlockSpec(block_shape, index_map, pipeline_mode=pl.Buffered(depth))
    except Exception:
        return pl.BlockSpec(block_shape, index_map)


@functools.partial(jax.jit,
                   static_argnames=("target_tile_bytes", "compute_dtype", "precision"))
def torch_fm_forward(x, V, w, b, *, target_tile_bytes=2 << 20,
                     compute_dtype=jnp.bfloat16, precision=None):
    """TorchFM forward. x: (B, n), V: (n, k), w: (n, 1), b: (1, 1) -> (B, 1)."""
    B, n = x.shape
    k = V.shape[1]
    itemsize = jnp.dtype(compute_dtype).itemsize
    sub = 16 if itemsize == 2 else 8                    # sublane granularity
    n_lane = _round_up(n, 128)
    k_lane = _round_up(k, 128)

    # ---- wrapper-side precompute (hoisted out of the per-tile path) ----------
    x_c = x.astype(compute_dtype)
    V_c = V.astype(compute_dtype)
    # s from the compute-dtype V, so the algebraic rewrite matches the precision
    # actually seen by the MXU path.
    Vf = V_c.astype(jnp.float32)
    s = jnp.sum(Vf * Vf, axis=1)                                             # (n,)
    coef = jnp.stack([w.astype(jnp.float32).reshape(n), -0.5 * s], axis=0)   # (2, n)
    b_smem = jnp.asarray(b, jnp.float32).reshape(1, 1)

    # ---- generation-aware VMEM budget ----------------------------------------
    vmem_cap = _vmem_capacity_bytes()
    if vmem_cap >= (128 << 20):                  # v5e / v6e: 128 MiB per core
        ws_budget, limit_cap = 96 << 20, 112 << 20
    else:                                        # v7x-like: 64 MiB per TensorCore
        ws_budget, limit_cap = 30 << 20, 52 << 20
    is_small_vmem = vmem_cap < (100 << 20)

    # Resident blocks (V, coef) are still double-buffered by the BlockSpec
    # pipeline even though their index map is constant -> count them twice.
    resident_vmem = 2 * (_round_up(n, sub) * k_lane * itemsize + 8 * n_lane * 4)

    # ---- tile sizing ----------------------------------------------------------
    # In-kernel row chunk: keep f32 intermediates (xf, polynomial, x@V) ~<= 4 MiB.
    interm_row = 4 * n_lane * 4 + k_lane * 4
    chunk = max(sub, min(1024, _round_down((4 << 20) // interm_row, sub)))

    # Rows wanted from DMA efficiency: ~target_tile_bytes of useful x per step.
    rows_target = max(sub, _round_up(_cdiv(target_tile_bytes, max(1, n * itemsize)), sub))

    # Rows allowed by the VMEM working-set budget: x tile (lane-padded, up to 3
    # buffers) + (tile_b, 1) output (pads to 128 lanes in VMEM, 2 buffers).
    row_vmem = 3 * n_lane * itemsize + 2 * 128 * 4
    rows_vmem = max(sub, _round_down(max(0, ws_budget - resident_vmem) // row_vmem, sub))

    rows = min(rows_target, rows_vmem, _round_up(B, sub))
    if rows <= chunk:
        chunk = max(sub, _round_up(rows, sub))
        num_chunks = 1
    else:
        num_chunks = rows // chunk
    tile_b = num_chunks * chunk
    num_tiles = _cdiv(B, tile_b)

    # v7x megacore: ensure >= 2 batch tiles so the "parallel" grid axis can be
    # sharded across both TensorCores (skip tiny single-chunk shapes: neutral).
    if is_small_vmem and num_tiles == 1 and num_chunks >= 2:
        num_chunks = _cdiv(num_chunks, 2)
        tile_b = num_chunks * chunk
        num_tiles = _cdiv(B, tile_b)

    b_pad = num_tiles * tile_b
    if b_pad != B:
        x_c = jnp.pad(x_c, ((0, b_pad - B), (0, 0)))   # zero rows -> out = b; sliced off

    # Deepen pipelining on the streamed x when the grid is long enough.
    x_depth = 3 if num_tiles >= 3 else 2

    vmem_need = (x_depth * _round_up(tile_b, sub) * n_lane * itemsize
                 + 2 * _round_up(tile_b, 8) * 128 * 4
                 + resident_vmem
                 + (8 << 20))          # chunk intermediates + Mosaic scratch headroom
    vmem_limit = int(min(limit_cap, max(24 << 20, vmem_need)))

    kernel = functools.partial(fm_kernel, chunk=chunk, num_chunks=num_chunks,
                               precision=precision)

    out = pl.pallas_call(
        kernel,
        out_shape=jax.ShapeDtypeStruct((b_pad, 1), jnp.float32),
        grid_spec=pl.GridSpec(
            grid=(num_tiles,),
            in_specs=[
                _maybe_buffered_spec((tile_b, n), lambda i: (i, 0), x_depth),  # x: streamed
                pl.BlockSpec((n, k), lambda i: (0, 0)),                        # V: resident
                pl.BlockSpec((2, n), lambda i: (0, 0)),                        # coef: resident
                pl.BlockSpec(memory_space=pltpu.MemorySpace.SMEM),             # b: SMEM scalar
            ],
            out_specs=pl.BlockSpec((tile_b, 1), lambda i: (i, 0)),
        ),
        compiler_params=pltpu.CompilerParams(
            dimension_semantics=("parallel",),
            vmem_limit_bytes=vmem_limit,
        ),
    )(x_c, V_c, coef, b_smem)
    return out[:B]


def fm_reference(x, V, w, b):
    """Original TorchFM algebra, matmuls at HIGHEST precision (golden reference)."""
    hp = jax.lax.Precision.HIGHEST
    out_1 = jnp.sum(jnp.matmul(x, V, precision=hp) ** 2, axis=1, keepdims=True)
    out_2 = jnp.sum(jnp.matmul(x ** 2, V ** 2, precision=hp), axis=1, keepdims=True)
    out_inter = 0.5 * (out_1 - out_2)
    out_linear = jnp.matmul(x, w, precision=hp) + b
    return out_linear + out_inter


if __name__ == "__main__":
    # Small shapes consistent with the module: n_features=32, k=16.
    B, n, k = 200, 32, 16

    key = jax.random.PRNGKey(0)
    kx, kv, kw, kb, kx2 = jax.random.split(key, 5)

    # Round x / V to the bf16 grid so the bf16 fast path, the f32 path and the
    # exact-precision reference all agree tightly (the MXU is bf16-native).
    x = jax.random.normal(kx, (B, n), dtype=jnp.float32)
    x = x.astype(jnp.bfloat16).astype(jnp.float32)
    V = jax.random.normal(kv, (n, k), dtype=jnp.float32)
    V = V.astype(jnp.bfloat16).astype(jnp.float32)
    bound = 1.0 / (n ** 0.5)
    w = jax.random.uniform(kw, (n, 1), minval=-bound, maxval=bound, dtype=jnp.float32)
    b = jax.random.uniform(kb, (1, 1), minval=-bound, maxval=bound, dtype=jnp.float32)

    ref = fm_reference(x, V, w, b)

    # 1) bf16 fast path, auto-sized tiles (tiny B -> collapses to a single tile).
    out_bf16 = jax.block_until_ready(torch_fm_forward(x, V, w, b))
    assert out_bf16.shape == (B, 1)
    assert jnp.allclose(out_bf16, ref, atol=2e-2, rtol=1e-3), float(
        jnp.max(jnp.abs(out_bf16 - ref)))

    # 2) Forced multi-tile grid (exercises streaming, 3-deep buffering, padding).
    out_tiled = jax.block_until_ready(
        torch_fm_forward(x, V, w, b, target_tile_bytes=2048))
    assert out_tiled.shape == (B, 1)
    assert jnp.allclose(out_tiled, ref, atol=2e-2, rtol=1e-3), float(
        jnp.max(jnp.abs(out_tiled - ref)))

    # 3) f32 path (default MXU precision; pass precision=HIGHEST for bf16x3).
    out_f32 = jax.block_until_ready(
        torch_fm_forward(x, V, w, b, compute_dtype=jnp.float32))
    assert out_f32.shape == (B, 1)
    assert jnp.allclose(out_f32, ref, atol=2e-2, rtol=1e-3), float(
        jnp.max(jnp.abs(out_f32 - ref)))

    # 4) Larger batch: exercises the in-kernel row-chunk loop (num_chunks > 1).
    B2 = 4096
    x2 = jax.random.normal(kx2, (B2, n), dtype=jnp.float32)
    x2 = x2.astype(jnp.bfloat16).astype(jnp.float32)
    ref2 = fm_reference(x2, V, w, b)
    out2 = jax.block_until_ready(torch_fm_forward(x2, V, w, b))
    assert out2.shape == (B2, 1)
    assert jnp.allclose(out2, ref2, atol=2e-2, rtol=1e-3), float(
        jnp.max(jnp.abs(out2 - ref2)))

    print("KERNEL_OK")
</pallas_src>

<mosaic_0001>
module attributes {stable_mosaic.version = 11 : i64} {
  func.func @fm_kernel(%arg0: i32, %arg1: memref<208x32xbf16, #tpu.memory_space<vmem>>, %arg2: memref<32x16xbf16, #tpu.memory_space<vmem>>, %arg3: memref<2x32xf32, #tpu.memory_space<vmem>>, %arg4: memref<1x1xf32, #tpu.memory_space<smem>>, %arg5: memref<208x1xf32, #tpu.memory_space<vmem>>) attributes {dimension_semantics = [#tpu.dimension_semantics<parallel>], iteration_bounds = array<i64: 1>, scalar_prefetch = 0 : i64, scratch_operands = 0 : i64, tpu.core_type = #tpu.core_type<tc>, window_params = [{transform_indices = @transform_0, window_bounds = array<i64: 208, 32>}, {pipeline_mode = #tpu.pipeline_mode<synchronous>, transform_indices = @transform_1, window_bounds = array<i64: 32, 16>}, {pipeline_mode = #tpu.pipeline_mode<synchronous>, transform_indices = @transform_2, window_bounds = array<i64: 2, 32>}, {transform_indices = @transform_3, window_bounds = array<i64: 1, 1>}, {transform_indices = @transform_4, window_bounds = array<i64: 208, 1>}]} {
    %c0 = arith.constant 0 : index
    %c0_0 = arith.constant 0 : index
    %0 = memref.load %arg4[%c0, %c0_0] : memref<1x1xf32, #tpu.memory_space<smem>>
    %c0_1 = arith.constant 0 : index
    %c0_2 = arith.constant 0 : index
    %1 = vector.load %arg1[%c0_1, %c0_2] : memref<208x32xbf16, #tpu.memory_space<vmem>>, vector<208x32xbf16>
    %c0_3 = arith.constant 0 : index
    %c0_4 = arith.constant 0 : index
    %2 = vector.load %arg2[%c0_3, %c0_4] : memref<32x16xbf16, #tpu.memory_space<vmem>>, vector<32x16xbf16>
    %cst = arith.constant dense<0.000000e+00> : vector<208x16xf32>
    %3 = tpu.matmul %1, %2, %cst {dimension_numbers = #tpu.dot_dimension_numbers<[1], [0], [0], [1], [0, 0, 1, 1], [], []>} : vector<208x32xbf16>, vector<32x16xbf16>, vector<208x16xf32> -> vector<208x16xf32>
    %4 = arith.mulf %3, %3 : vector<208x16xf32>
    %cst_5 = arith.constant dense<0.000000e+00> : vector<208xf32>
    %5 = vector.multi_reduction <add>, %4, %cst_5 [1] : vector<208x16xf32> to vector<208xf32>
    %6 = vector.shape_cast %5 : vector<208xf32> to vector<208x1xf32>
    %c0_6 = arith.constant 0 : index
    %c0_7 = arith.constant 0 : index
    %7 = vector.load %arg3[%c0_6, %c0_7] : memref<2x32xf32, #tpu.memory_space<vmem>>, vector<2x32xf32>
    %8 = vector.extract_strided_slice %7 {offsets = [0, 0], sizes = [1, 32], strides = [1, 1]} : vector<2x32xf32> to vector<1x32xf32>
    %9 = vector.extract_strided_slice %7 {offsets = [1, 0], sizes = [1, 32], strides = [1, 1]} : vector<2x32xf32> to vector<1x32xf32>
    %10 = arith.extf %1 : vector<208x32xbf16> to vector<208x32xf32>
    %11 = vector.broadcast %8 : vector<1x32xf32> to vector<208x32xf32>
    %12 = arith.mulf %10, %11 : vector<208x32xf32>
    %13 = arith.mulf %10, %10 : vector<208x32xf32>
    %14 = vector.broadcast %9 : vector<1x32xf32> to vector<208x32xf32>
    %15 = arith.mulf %13, %14 : vector<208x32xf32>
    %16 = arith.addf %12, %15 : vector<208x32xf32>
    %cst_8 = arith.constant dense<0.000000e+00> : vector<208xf32>
    %17 = vector.multi_reduction <add>, %16, %cst_8 [1] : vector<208x32xf32> to vector<208xf32>
    %18 = vector.shape_cast %17 : vector<208xf32> to vector<208x1xf32>
    %cst_9 = arith.constant 5.000000e-01 : f32
    %19 = vector.broadcast %cst_9 : f32 to vector<208x1xf32>
    %20 = arith.mulf %19, %6 : vector<208x1xf32>
    %21 = arith.addf %20, %18 : vector<208x1xf32>
    %22 = vector.broadcast %0 : f32 to vector<208x1xf32>
    %23 = arith.addf %21, %22 : vector<208x1xf32>
    %c0_10 = arith.constant 0 : index
    %c0_11 = arith.constant 0 : index
    %24 = vector.load %arg5[%c0_10, %c0_11] : memref<208x1xf32, #tpu.memory_space<vmem>>, vector<208x1xf32>
    tpu.vector_store %arg5[%c0_10, %c0_11], %23 {strides = array<i32>} : memref<208x1xf32, #tpu.memory_space<vmem>>, vector<208x1xf32>,
    return
  }
  func.func @transform_0(%arg0: i32) -> (i32, i32) {
    %c0_i32 = arith.constant 0 : i32
    %c0_i32_0 = arith.constant 0 : i32
    return %arg0, %c0_i32 : i32, i32
  }
  func.func @transform_1(%arg0: i32) -> (i32, i32) {
    %c0_i32 = arith.constant 0 : i32
    %c0_i32_0 = arith.constant 0 : i32
    %c0_i32_1 = arith.constant 0 : i32
    return %c0_i32, %c0_i32_0 : i32, i32
  }
  func.func @transform_2(%arg0: i32) -> (i32, i32) {
    %c0_i32 = arith.constant 0 : i32
    %c0_i32_0 = arith.constant 0 : i32
    %c0_i32_1 = arith.constant 0 : i32
    return %c0_i32, %c0_i32_0 : i32, i32
  }
  func.func @transform_3(%arg0: i32) -> (i32, i32) {
    %c0_i32 = arith.constant 0 : i32
    %c0_i32_0 = arith.constant 0 : i32
    %c0_i32_1 = arith.constant 0 : i32
    return %c0_i32, %c0_i32_0 : i32, i32
  }
  func.func @transform_4(%arg0: i32) -> (i32, i32) {
    %c0_i32 = arith.constant 0 : i32
    %c0_i32_0 = arith.constant 0 : i32
    return %arg0, %c0_i32 : i32, i32
  }
}

</mosaic_0001>

<llo_original>
// kernel: torch_fm_forward.1
$region0: #{torch_fm_forward.1}
  #allocation0 [shape = 'u32[]', space=smem, size = 0x4, offset = 0x4, fixed_abs, tag = 'smem constant byte address 0x4 - core index']
  #allocation1 [shape = 'u32[72,128]{1,0:T(1,128)}', space=vmem, size = 0x9000, scoped, tag = 'internal scratch']
  #allocation2 [shape = 'f32[1,1]{1,0:T(1,128)S(6)}', space=smem, size = 0x200, scoped, tag = 'scoped memory for torch_fm_forward.1']
  %s0 = inlined_call_operand.vmem [shape: bf16[208,32], index: 0, kind: input, shape index: {}]
  %s1 = inlined_call_operand.vmem [shape: bf16[32,16], index: 1, kind: input, shape index: {}]
  %s2 = inlined_call_operand.vmem [shape: f32[2,32], index: 2, kind: input, shape index: {}]
  %s3 = inlined_call_operand.<no memory space> [shape: f32[1,1], index: 3, kind: input, shape index: {}]
  %s4 = inlined_call_operand.vmem [shape: f32[208,1], index: 4, kind: output, shape index: {}]
  %s5 = sld [smem:[#allocation0]]
  $region26: #{torch_fm_forward.1} parent=0
    _
  %s7 = ssub.s32 1, %s5
  %s8 = scalar_select 0, %s7, %s5
  %9 = sst [smem:[#allocation2]] %s3
  // Predicated region
  $region2: #{torch_fm_forward.1} parent=0 // pred_check
    _
  $region3: #{torch_fm_forward.1} parent=0 // pred_check_branch
    %11 = sbr.rel (0) target = $region5
  $region4: #{torch_fm_forward.1} parent=0 // pred_region
    _
  $region5: #{torch_fm_forward.1} parent=0 // pred_fallthru
    _
  // Predicated region
  $region6: #{torch_fm_forward.1} parent=0 // pred_check
    _
  $region7: #{torch_fm_forward.1} parent=0 // pred_check_branch
    %13 = sbr.rel (0) target = $region9
  $region8: #{torch_fm_forward.1} parent=0 // pred_region
    _
  $region9: #{torch_fm_forward.1} parent=0 // pred_fallthru
    _
  // Predicated region
  $region10: #{torch_fm_forward.1} parent=0 // pred_check
    _
  $region11: #{torch_fm_forward.1} parent=0 // pred_check_branch
    %15 = sbr.rel (0) target = $region13
  $region12: #{torch_fm_forward.1} parent=0 // pred_region
    _
  $region13: #{torch_fm_forward.1} parent=0 // pred_fallthru
    _
  // Predicated region
  $region14: #{torch_fm_forward.1} parent=0 // pred_check
    _
  $region15: #{torch_fm_forward.1} parent=0 // pred_check_branch
    %17 = sbr.rel (0) target = $region17
  $region16: #{torch_fm_forward.1} parent=0 // pred_region
    _
  $region17: #{torch_fm_forward.1} parent=0 // pred_fallthru
    _
  %s19 = sld [smem:[#allocation2]]
  %v20 = vld [vmem:[%s0] sm:$0xf]
  %v21 = vld [vmem:[%s0 + $0x4] sm:$0xf]
  %v22 = vld [vmem:[%s0 + $0x8] sm:$0xf]
  %v23 = vld [vmem:[%s0 + $0xc] sm:$0xf]
  %v24 = vld [vmem:[%s0 + $0x10] sm:$0xf]
  %v25 = vld [vmem:[%s0 + $0x14] sm:$0xf]
  %v26 = vld [vmem:[%s0 + $0x18] sm:$0xf]
  %v27 = vld [vmem:[%s0 + $0x1c] sm:$0xf]
  %v28 = vld [vmem:[%s0 + $0x20] sm:$0xf]
  %v29 = vld [vmem:[%s0 + $0x24] sm:$0xf]
  %v30 = vld [vmem:[%s0 + $0x28] sm:$0xf]
  %v31 = vld [vmem:[%s0 + $0x2c] sm:$0xf]
  %v32 = vld [vmem:[%s0 + $0x30] sm:$0xf]
  %v33 = vld [vmem:[%s0 + $0x34] sm:$0xf]
  %v34 = vld [vmem:[%s0 + $0x38] sm:$0xf]
  %v35 = vld [vmem:[%s0 + $0x3c] sm:$0xf]
  %v36 = vld [vmem:[%s0 + $0x40] sm:$0xf]
  %v37 = vld [vmem:[%s0 + $0x44] sm:$0xf]
  %v38 = vld [vmem:[%s0 + $0x48] sm:$0xf]
  %v39 = vld [vmem:[%s0 + $0x4c] sm:$0xf]
  %v40 = vld [vmem:[%s0 + $0x50] sm:$0xf]
  %v41 = vld [vmem:[%s0 + $0x54] sm:$0xf]
  %v42 = vld [vmem:[%s0 + $0x58] sm:$0xf]
  %v43 = vld [vmem:[%s0 + $0x5c] sm:$0xf]
  %v44 = vld [vmem:[%s0 + $0x60] sm:$0xf]
  %v45 = vld [vmem:[%s0 + $0x64] sm:$0xf]
  %v46 = vld [vmem:[%s1] sm:$0xf]
  %v47 = vld [vmem:[%s1 + $0x4] sm:$0xf]
  %v48 = vld [vmem:[%s1 + $0x8] sm:$0xf]
  %v49 = vld [vmem:[%s1 + $0xc] sm:$0xf]
  %v76 = vunpack.c.l.b16 %v20
  %v77 = vunpack.c.l.b16 %v21
  %v78 = vunpack.c.l.b16 %v22
  %v79 = vunpack.c.l.b16 %v23
  %v80 = vunpack.c.l.b16 %v24
  %v81 = vunpack.c.l.b16 %v25
  %v82 = vunpack.c.l.b16 %v26
  %v83 = vunpack.c.l.b16 %v27
  %v84 = vunpack.c.l.b16 %v28
  %v85 = vunpack.c.l.b16 %v29
  %v86 = vunpack.c.l.b16 %v30
  %v87 = vunpack.c.l.b16 %v31
  %v88 = vunpack.c.l.b16 %v32
  %v89 = vunpack.c.l.b16 %v33
  %v90 = vunpack.c.l.b16 %v34
  %v91 = vunpack.c.l.b16 %v35
  %v92 = vunpack.c.l.b16 %v36
  %v93 = vunpack.c.l.b16 %v37
  %v94 = vunpack.c.l.b16 %v38
  %v95 = vunpack.c.l.b16 %v39
  %v96 = vunpack.c.l.b16 %v40
  %v97 = vunpack.c.l.b16 %v41
  %v98 = vunpack.c.l.b16 %v42
  %v99 = vunpack.c.l.b16 %v43
  %v100 = vunpack.c.l.b16 %v44
  %v101 = vunpack.c.l.b16 %v45
  %v102 = vpack.c.b16 %v77, %v76
  %v103 = vpack.c.b16 %v79, %v78
  %v104 = vpack.c.b16 %v81, %v80
  %v105 = vpack.c.b16 %v83, %v82
  %v106 = vpack.c.b16 %v85, %v84
  %v107 = vpack.c.b16 %v87, %v86
  %v108 = vpack.c.b16 %v89, %v88
  %v109 = vpack.c.b16 %v91, %v90
  %v110 = vpack.c.b16 %v93, %v92
  %v111 = vpack.c.b16 %v95, %v94
  %v112 = vpack.c.b16 %v97, %v96
  %v113 = vpack.c.b16 %v99, %v98
  %v114 = vpack.c.b16 %v101, %v100
  %v119 = vunpack.c.l.b16 %v46
  %v120 = vunpack.c.l.b16 %v47
  %v121 = vunpack.c.l.b16 %v48
  %v122 = vunpack.c.l.b16 %v49
  %v123 = vpack.c.b16 %v120, %v119
  %v124 = vpack.c.b16 %v122, %v121
  %vm127 = vcmask 261120
  %v129 = vsel %vm127, %v102, 0
  %v132 = vsel %vm127, %v103, 0
  %v135 = vsel %vm127, %v104, 0
  %v138 = vsel %vm127, %v105, 0
  %v141 = vsel %vm127, %v106, 0
  %v144 = vsel %vm127, %v107, 0
  %v147 = vsel %vm127, %v108, 0
  %v150 = vsel %vm127, %v109, 0
  %v153 = vsel %vm127, %v110, 0
  %v156 = vsel %vm127, %v111, 0
  %v159 = vsel %vm127, %v112, 0
  %v162 = vsel %vm127, %v113, 0
  %v165 = vsel %vm127, %v114, 0
  %167 = vmatpush.bf16.msra.mxu0 0
  %168 = vmatpush.bf16.msra.mxu0 0
  %169 = vmatpush.bf16.msra.mxu0 0
  %170 = vmatpush.bf16.msra.mxu0 0
  %171 = vmatpush.bf16.msra.mxu0 0
  %172 = vmatpush.bf16.msra.mxu0 0
  %173 = vmatpush.bf16.msra.mxu0 %v124
  %174 = vmatpush.bf16.msra.mxu0 %v123
  %175 = vmatmul.bf16.gmra.mxu0 %v129
  %v176 = vpop.f32.mrf.mxu0
  %v177 = vadd.f32 0.0, %v176
  %v178 = vpop.f32.mrf.mxu0
  %v179 = vadd.f32 0.0, %v178
  %180 = vmatmul.bf16.gmra.mxu0 %v132
  %v181 = vpop.f32.mrf.mxu0
  %v182 = vadd.f32 0.0, %v181
  %v183 = vpop.f32.mrf.mxu0
  %v184 = vadd.f32 0.0, %v183
  %185 = vmatmul.bf16.gmra.mxu0 %v135
  %v186 = vpop.f32.mrf.mxu0
  %v187 = vadd.f32 0.0, %v186
  %v188 = vpop.f32.mrf.mxu0
  %v189 = vadd.f32 0.0, %v188
  %190 = vmatmul.bf16.gmra.mxu0 %v138
  %v191 = vpop.f32.mrf.mxu0
  %v192 = vadd.f32 0.0, %v191
  %v193 = vpop.f32.mrf.mxu0
  %v194 = vadd.f32 0.0, %v193
  %195 = vmatmul.bf16.gmra.mxu0 %v141
  %v196 = vpop.f32.mrf.mxu0
  %v197 = vadd.f32 0.0, %v196
  %v198 = vpop.f32.mrf.mxu0
  %v199 = vadd.f32 0.0, %v198
  %200 = vmatmul.bf16.gmra.mxu0 %v144
  %v201 = vpop.f32.mrf.mxu0
  %v202 = vadd.f32 0.0, %v201
  %v203 = vpop.f32.mrf.mxu0
  %v204 = vadd.f32 0.0, %v203
  %205 = vmatmul.bf16.gmra.mxu0 %v147
  %v206 = vpop.f32.mrf.mxu0
  %v207 = vadd.f32 0.0, %v206
  %v208 = vpop.f32.mrf.mxu0
  %v209 = vadd.f32 0.0, %v208
  %210 = vmatmul.bf16.gmra.mxu0 %v150
  %v211 = vpop.f32.mrf.mxu0
  %v212 = vadd.f32 0.0, %v211
  %v213 = vpop.f32.mrf.mxu0
  %v214 = vadd.f32 0.0, %v213
  %215 = vmatmul.bf16.gmra.mxu0 %v153
  %v216 = vpop.f32.mrf.mxu0
  %v217 = vadd.f32 0.0, %v216
  %v218 = vpop.f32.mrf.mxu0
  %v219 = vadd.f32 0.0, %v218
  %220 = vmatmul.bf16.gmra.mxu0 %v156
  %v221 = vpop.f32.mrf.mxu0
  %v222 = vadd.f32 0.0, %v221
  %v223 = vpop.f32.mrf.mxu0
  %v224 = vadd.f32 0.0, %v223
  %225 = vmatmul.bf16.gmra.mxu0 %v159
  %v226 = vpop.f32.mrf.mxu0
  %v227 = vadd.f32 0.0, %v226
  %v228 = vpop.f32.mrf.mxu0
  %v229 = vadd.f32 0.0, %v228
  %230 = vmatmul.bf16.gmra.mxu0 %v162
  %v231 = vpop.f32.mrf.mxu0
  %v232 = vadd.f32 0.0, %v231
  %v233 = vpop.f32.mrf.mxu0
  %v234 = vadd.f32 0.0, %v233
  %235 = vmatmul.bf16.gmra.mxu0 %v165
  %v236 = vpop.f32.mrf.mxu0
  %v237 = vadd.f32 0.0, %v236
  %v238 = vpop.f32.mrf.mxu0
  %v239 = vadd.f32 0.0, %v238
  %240 = vdwg.mxu0
  %v241 = vmul.f32 %v177, %v177
  %v242 = vmul.f32 %v179, %v179
  %v243 = vmul.f32 %v182, %v182
  %v244 = vmul.f32 %v184, %v184
  %v245 = vmul.f32 %v187, %v187
  %v246 = vmul.f32 %v189, %v189
  %v247 = vmul.f32 %v192, %v192
  %v248 = vmul.f32 %v194, %v194
  %v249 = vmul.f32 %v197, %v197
  %v250 = vmul.f32 %v199, %v199
  %v251 = vmul.f32 %v202, %v202
  %v252 = vmul.f32 %v204, %v204
  %v253 = vmul.f32 %v207, %v207
  %v254 = vmul.f32 %v209, %v209
  %v255 = vmul.f32 %v212, %v212
  %v256 = vmul.f32 %v214, %v214
  %v257 = vmul.f32 %v217, %v217
  %v258 = vmul.f32 %v219, %v219
  %v259 = vmul.f32 %v222, %v222
  %v260 = vmul.f32 %v224, %v224
  %v261 = vmul.f32 %v227, %v227
  %v262 = vmul.f32 %v229, %v229
  %v263 = vmul.f32 %v232, %v232
  %v264 = vmul.f32 %v234, %v234
  %v265 = vmul.f32 %v237, %v237
  %v266 = vmul.f32 %v239, %v239
  %vm267 = vcmask 130048
  %v268 = vsel %vm267, %v241, 0.0
  %269 = vadd.xlane.f32.xlu0 %v268
  %v270 = vpop.xlane.xlu0 %269
  %v271 = vsel %vm267, %v242, 0.0
  %272 = vadd.xlane.f32.xlu0 %v271
  %v273 = vpop.xlane.xlu0 %272
  %v274 = vsel %vm267, %v243, 0.0
  %275 = vadd.xlane.f32.xlu0 %v274
  %v276 = vpop.xlane.xlu0 %275
  %v277 = vsel %vm267, %v244, 0.0
  %278 = vadd.xlane.f32.xlu0 %v277
  %v279 = vpop.xlane.xlu0 %278
  %v280 = vsel %vm267, %v245, 0.0
  %281 = vadd.xlane.f32.xlu0 %v280
  %v282 = vpop.xlane.xlu0 %281
  %v283 = vsel %vm267, %v246, 0.0
  %284 = vadd.xlane.f32.xlu0 %v283
  %v285 = vpop.xlane.xlu0 %284
  %v286 = vsel %vm267, %v247, 0.0
  %287 = vadd.xlane.f32.xlu0 %v286
  %v288 = vpop.xlane.xlu0 %287
  %v289 = vsel %vm267, %v248, 0.0
  %290 = vadd.xlane.f32.xlu0 %v289
  %v291 = vpop.xlane.xlu0 %290
  %v292 = vsel %vm267, %v249, 0.0
  %293 = vadd.xlane.f32.xlu0 %v292
  %v294 = vpop.xlane.xlu0 %293
  %v295 = vsel %vm267, %v250, 0.0
  %296 = vadd.xlane.f32.xlu0 %v295
  %v297 = vpop.xlane.xlu0 %296
  %v298 = vsel %vm267, %v251, 0.0
  %299 = vadd.xlane.f32.xlu0 %v298
  %v300 = vpop.xlane.xlu0 %299
  %v301 = vsel %vm267, %v252, 0.0
  %302 = vadd.xlane.f32.xlu0 %v301
  %v303 = vpop.xlane.xlu0 %302
  %v304 = vsel %vm267, %v253, 0.0
  %305 = vadd.xlane.f32.xlu0 %v304
  %v306 = vpop.xlane.xlu0 %305
  %v307 = vsel %vm267, %v254, 0.0
  %308 = vadd.xlane.f32.xlu0 %v307
  %v309 = vpop.xlane.xlu0 %308
  %v310 = vsel %vm267, %v255, 0.0
  %311 = vadd.xlane.f32.xlu0 %v310
  %v312 = vpop.xlane.xlu0 %311
  %v313 = vsel %vm267, %v256, 0.0
  %314 = vadd.xlane.f32.xlu0 %v313
  %v315 = vpop.xlane.xlu0 %314
  %v316 = vsel %vm267, %v257, 0.0
  %317 = vadd.xlane.f32.xlu0 %v316
  %v318 = vpop.xlane.xlu0 %317
  %v319 = vsel %vm267, %v258, 0.0
  %320 = vadd.xlane.f32.xlu0 %v319
  %v321 = vpop.xlane.xlu0 %320
  %v322 = vsel %vm267, %v259, 0.0
  %323 = vadd.xlane.f32.xlu0 %v322
  %v324 = vpop.xlane.xlu0 %323
  %v325 = vsel %vm267, %v260, 0.0
  %326 = vadd.xlane.f32.xlu0 %v325
  %v327 = vpop.xlane.xlu0 %326
  %v328 = vsel %vm267, %v261, 0.0
  %329 = vadd.xlane.f32.xlu0 %v328
  %v330 = vpop.xlane.xlu0 %329
  %v331 = vsel %vm267, %v262, 0.0
  %332 = vadd.xlane.f32.xlu0 %v331
  %v333 = vpop.xlane.xlu0 %332
  %v334 = vsel %vm267, %v263, 0.0
  %335 = vadd.xlane.f32.xlu0 %v334
  %v336 = vpop.xlane.xlu0 %335
  %v337 = vsel %vm267, %v264, 0.0
  %338 = vadd.xlane.f32.xlu0 %v337
  %v339 = vpop.xlane.xlu0 %338
  %v340 = vsel %vm267, %v265, 0.0
  %341 = vadd.xlane.f32.xlu0 %v340
  %v342 = vpop.xlane.xlu0 %341
  %v343 = vsel %vm267, %v266, 0.0
  %344 = vadd.xlane.f32.xlu0 %v343
  %v345 = vpop.xlane.xlu0 %344
  %v346 = vld [vmem:[%s2] sm:$0x3]
  %v347 = vunpack.c.l.bf16 %v20
  %v348 = vunpack.c.l.bf16 %v21
  %v349 = vunpack.c.l.bf16 %v22
  %v350 = vunpack.c.l.bf16 %v23
  %v351 = vunpack.c.l.bf16 %v24
  %v352 = vunpack.c.l.bf16 %v25
  %v353 = vunpack.c.l.bf16 %v26
  %v354 = vunpack.c.l.bf16 %v27
  %v355 = vunpack.c.l.bf16 %v28
  %v356 = vunpack.c.l.bf16 %v29
  %v357 = vunpack.c.l.bf16 %v30
  %v358 = vunpack.c.l.bf16 %v31
  %v359 = vunpack.c.l.bf16 %v32
  %v360 = vunpack.c.l.bf16 %v33
  %v361 = vunpack.c.l.bf16 %v34
  %v362 = vunpack.c.l.bf16 %v35
  %v363 = vunpack.c.l.bf16 %v36
  %v364 = vunpack.c.l.bf16 %v37
  %v365 = vunpack.c.l.bf16 %v38
  %v366 = vunpack.c.l.bf16 %v39
  %v367 = vunpack.c.l.bf16 %v40
  %v368 = vunpack.c.l.bf16 %v41
  %v369 = vunpack.c.l.bf16 %v42
  %v370 = vunpack.c.l.bf16 %v43
  %v371 = vunpack.c.l.bf16 %v44
  %v372 = vunpack.c.l.bf16 %v45
  %v373 = vperm.slane %v346, 0
  %v374 = vmul.f32 %v347, %v373
  %v375 = vmul.f32 %v348, %v373
  %v376 = vmul.f32 %v349, %v373
  %v377 = vmul.f32 %v350, %v373
  %v378 = vmul.f32 %v351, %v373
  %v379 = vmul.f32 %v352, %v373
  %v380 = vmul.f32 %v353, %v373
  %v381 = vmul.f32 %v354, %v373
  %v382 = vmul.f32 %v355, %v373
  %v383 = vmul.f32 %v356, %v373
  %v384 = vmul.f32 %v357, %v373
  %v385 = vmul.f32 %v358, %v373
  %v386 = vmul.f32 %v359, %v373
  %v387 = vmul.f32 %v360, %v373
  %v388 = vmul.f32 %v361, %v373
  %v389 = vmul.f32 %v362, %v373
  %v390 = vmul.f32 %v363, %v373
  %v391 = vmul.f32 %v364, %v373
  %v392 = vmul.f32 %v365, %v373
  %v393 = vmul.f32 %v366, %v373
  %v394 = vmul.f32 %v367, %v373
  %v395 = vmul.f32 %v368, %v373
  %v396 = vmul.f32 %v369, %v373
  %v397 = vmul.f32 %v370, %v373
  %v398 = vmul.f32 %v371, %v373
  %v399 = vmul.f32 %v372, %v373
  %v400 = vmul.f32 %v347, %v347
  %v401 = vmul.f32 %v348, %v348
  %v402 = vmul.f32 %v349, %v349
  %v403 = vmul.f32 %v350, %v350
  %v404 = vmul.f32 %v351, %v351
  %v405 = vmul.f32 %v352, %v352
  %v406 = vmul.f32 %v353, %v353
  %v407 = vmul.f32 %v354, %v354
  %v408 = vmul.f32 %v355, %v355
  %v409 = vmul.f32 %v356, %v356
  %v410 = vmul.f32 %v357, %v357
  %v411 = vmul.f32 %v358, %v358
  %v412 = vmul.f32 %v359, %v359
  %v413 = vmul.f32 %v360, %v360
  %v414 = vmul.f32 %v361, %v361
  %v415 = vmul.f32 %v362, %v362
  %v416 = vmul.f32 %v363, %v363
  %v417 = vmul.f32 %v364, %v364
  %v418 = vmul.f32 %v365, %v365
  %v419 = vmul.f32 %v366, %v366
  %v420 = vmul.f32 %v367, %v367
  %v421 = vmul.f32 %v368, %v368
  %v422 = vmul.f32 %v369, %v369
  %v423 = vmul.f32 %v370, %v370
  %v424 = vmul.f32 %v371, %v371
  %v425 = vmul.f32 %v372, %v372
  %v426 = vperm.slane %v346, 1
  %v427 = vmul.f32 %v400, %v426
  %v428 = vmul.f32 %v401, %v426
  %v429 = vmul.f32 %v402, %v426
  %v430 = vmul.f32 %v403, %v426
  %v431 = vmul.f32 %v404, %v426
  %v432 = vmul.f32 %v405, %v426
  %v433 = vmul.f32 %v406, %v426
  %v434 = vmul.f32 %v407, %v426
  %v435 = vmul.f32 %v408, %v426
  %v436 = vmul.f32 %v409, %v426
  %v437 = vmul.f32 %v410, %v426
  %v438 = vmul.f32 %v411, %v426
  %v439 = vmul.f32 %v412, %v426
  %v440 = vmul.f32 %v413, %v426
  %v441 = vmul.f32 %v414, %v426
  %v442 = vmul.f32 %v415, %v426
  %v443 = vmul.f32 %v416, %v426
  %v444 = vmul.f32 %v417, %v426
  %v445 = vmul.f32 %v418, %v426
  %v446 = vmul.f32 %v419, %v426
  %v447 = vmul.f32 %v420, %v426
  %v448 = vmul.f32 %v421, %v426
  %v449 = vmul.f32 %v422, %v426
  %v450 = vmul.f32 %v423, %v426
  %v451 = vmul.f32 %v424, %v426
  %v452 = vmul.f32 %v425, %v426
  %v453 = vadd.f32 %v374, %v427
  %v454 = vadd.f32 %v375, %v428
  %v455 = vadd.f32 %v376, %v429
  %v456 = vadd.f32 %v377, %v430
  %v457 = vadd.f32 %v378, %v431
  %v458 = vadd.f32 %v379, %v432
  %v459 = vadd.f32 %v380, %v433
  %v460 = vadd.f32 %v381, %v434
  %v461 = vadd.f32 %v382, %v435
  %v462 = vadd.f32 %v383, %v436
  %v463 = vadd.f32 %v384, %v437
  %v464 = vadd.f32 %v385, %v438
  %v465 = vadd.f32 %v386, %v439
  %v466 = vadd.f32 %v387, %v440
  %v467 = vadd.f32 %v388, %v441
  %v468 = vadd.f32 %v389, %v442
  %v469 = vadd.f32 %v390, %v443
  %v470 = vadd.f32 %v391, %v444
  %v471 = vadd.f32 %v392, %v445
  %v472 = vadd.f32 %v393, %v446
  %v473 = vadd.f32 %v394, %v447
  %v474 = vadd.f32 %v395, %v448
  %v475 = vadd.f32 %v396, %v449
  %v476 = vadd.f32 %v397, %v450
  %v477 = vadd.f32 %v398, %v451
  %v478 = vadd.f32 %v399, %v452
  %v479 = vsel %vm127, %v453, 0.0
  %480 = vadd.xlane.f32.xlu0 %v479
  %v481 = vpop.xlane.xlu0 %480
  %v482 = vsel %vm127, %v454, 0.0
  %483 = vadd.xlane.f32.xlu0 %v482
  %v484 = vpop.xlane.xlu0 %483
  %v485 = vsel %vm127, %v455, 0.0
  %486 = vadd.xlane.f32.xlu0 %v485
  %v487 = vpop.xlane.xlu0 %486
  %v488 = vsel %vm127, %v456, 0.0
  %489 = vadd.xlane.f32.xlu0 %v488
  %v490 = vpop.xlane.xlu0 %489
  %v491 = vsel %vm127, %v457, 0.0
  %492 = vadd.xlane.f32.xlu0 %v491
  %v493 = vpop.xlane.xlu0 %492
  %v494 = vsel %vm127, %v458, 0.0
  %495 = vadd.xlane.f32.xlu0 %v494
  %v496 = vpop.xlane.xlu0 %495
  %v497 = vsel %vm127, %v459, 0.0
  %498 = vadd.xlane.f32.xlu0 %v497
  %v499 = vpop.xlane.xlu0 %498
  %v500 = vsel %vm127, %v460, 0.0
  %501 = vadd.xlane.f32.xlu0 %v500
  %v502 = vpop.xlane.xlu0 %501
  %v503 = vsel %vm127, %v461, 0.0
  %504 = vadd.xlane.f32.xlu0 %v503
  %v505 = vpop.xlane.xlu0 %504
  %v506 = vsel %vm127, %v462, 0.0
  %507 = vadd.xlane.f32.xlu0 %v506
  %v508 = vpop.xlane.xlu0 %507
  %v509 = vsel %vm127, %v463, 0.0
  %510 = vadd.xlane.f32.xlu0 %v509
  %v511 = vpop.xlane.xlu0 %510
  %v512 = vsel %vm127, %v464, 0.0
  %513 = vadd.xlane.f32.xlu0 %v512
  %v514 = vpop.xlane.xlu0 %513
  %v515 = vsel %vm127, %v465, 0.0
  %516 = vadd.xlane.f32.xlu0 %v515
  %v517 = vpop.xlane.xlu0 %516
  %v518 = vsel %vm127, %v466, 0.0
  %519 = vadd.xlane.f32.xlu0 %v518
  %v520 = vpop.xlane.xlu0 %519
  %v521 = vsel %vm127, %v467, 0.0
  %522 = vadd.xlane.f32.xlu0 %v521
  %v523 = vpop.xlane.xlu0 %522
  %v524 = vsel %vm127, %v468, 0.0
  %525 = vadd.xlane.f32.xlu0 %v524
  %v526 = vpop.xlane.xlu0 %525
  %v527 = vsel %vm127, %v469, 0.0
  %528 = vadd.xlane.f32.xlu0 %v527
  %v529 = vpop.xlane.xlu0 %528
  %v530 = vsel %vm127, %v470, 0.0
  %531 = vadd.xlane.f32.xlu0 %v530
  %v532 = vpop.xlane.xlu0 %531
  %v533 = vsel %vm127, %v471, 0.0
  %534 = vadd.xlane.f32.xlu0 %v533
  %v535 = vpop.xlane.xlu0 %534
  %v536 = vsel %vm127, %v472, 0.0
  %537 = vadd.xlane.f32.xlu0 %v536
  %v538 = vpop.xlane.xlu0 %537
  %v539 = vsel %vm127, %v473, 0.0
  %540 = vadd.xlane.f32.xlu0 %v539
  %v541 = vpop.xlane.xlu0 %540
  %v542 = vsel %vm127, %v474, 0.0
  %543 = vadd.xlane.f32.xlu0 %v542
  %v544 = vpop.xlane.xlu0 %543
  %v545 = vsel %vm127, %v475, 0.0
  %546 = vadd.xlane.f32.xlu0 %v545
  %v547 = vpop.xlane.xlu0 %546
  %v548 = vsel %vm127, %v476, 0.0
  %549 = vadd.xlane.f32.xlu0 %v548
  %v550 = vpop.xlane.xlu0 %549
  %v551 = vsel %vm127, %v477, 0.0
  %552 = vadd.xlane.f32.xlu0 %v551
  %v553 = vpop.xlane.xlu0 %552
  %v554 = vsel %vm127, %v478, 0.0
  %555 = vadd.xlane.f32.xlu0 %v554
  %v556 = vpop.xlane.xlu0 %555
  %v557 = vmul.f32 %v270, 0.5
  %v558 = vmul.f32 %v273, 0.5
  %v559 = vmul.f32 %v276, 0.5
  %v560 = vmul.f32 %v279, 0.5
  %v561 = vmul.f32 %v282, 0.5
  %v562 = vmul.f32 %v285, 0.5
  %v563 = vmul.f32 %v288, 0.5
  %v564 = vmul.f32 %v291, 0.5
  %v565 = vmul.f32 %v294, 0.5
  %v566 = vmul.f32 %v297, 0.5
  %v567 = vmul.f32 %v300, 0.5
  %v568 = vmul.f32 %v303, 0.5
  %v569 = vmul.f32 %v306, 0.5
  %v570 = vmul.f32 %v309, 0.5
  %v571 = vmul.f32 %v312, 0.5
  %v572 = vmul.f32 %v315, 0.5
  %v573 = vmul.f32 %v318, 0.5
  %v574 = vmul.f32 %v321, 0.5
  %v575 = vmul.f32 %v324, 0.5
  %v576 = vmul.f32 %v327, 0.5
  %v577 = vmul.f32 %v330, 0.5
  %v578 = vmul.f32 %v333, 0.5
  %v579 = vmul.f32 %v336, 0.5
  %v580 = vmul.f32 %v339, 0.5
  %v581 = vmul.f32 %v342, 0.5
  %v582 = vmul.f32 %v345, 0.5
  %v583 = vadd.f32 %v557, %v481
  %v584 = vadd.f32 %v558, %v484
  %v585 = vadd.f32 %v559, %v487
  %v586 = vadd.f32 %v560, %v490
  %v587 = vadd.f32 %v561, %v493
  %v588 = vadd.f32 %v562, %v496
  %v589 = vadd.f32 %v563, %v499
  %v590 = vadd.f32 %v564, %v502
  %v591 = vadd.f32 %v565, %v505
  %v592 = vadd.f32 %v566, %v508
  %v593 = vadd.f32 %v567, %v511
  %v594 = vadd.f32 %v568, %v514
  %v595 = vadd.f32 %v569, %v517
  %v596 = vadd.f32 %v570, %v520
  %v597 = vadd.f32 %v571, %v523
  %v598 = vadd.f32 %v572, %v526
  %v599 = vadd.f32 %v573, %v529
  %v600 = vadd.f32 %v574, %v532
  %v601 = vadd.f32 %v575, %v535
  %v602 = vadd.f32 %v576, %v538
  %v603 = vadd.f32 %v577, %v541
  %v604 = vadd.f32 %v578, %v544
  %v605 = vadd.f32 %v579, %v547
  %v606 = vadd.f32 %v580, %v550
  %v607 = vadd.f32 %v581, %v553
  %v608 = vadd.f32 %v582, %v556
  %v609 = vstv %s19
  %v610 = vadd.f32 %v583, %v609
  %v611 = vadd.f32 %v584, %v609
  %v612 = vadd.f32 %v585, %v609
  %v613 = vadd.f32 %v586, %v609
  %v614 = vadd.f32 %v587, %v609
  %v615 = vadd.f32 %v588, %v609
  %v616 = vadd.f32 %v589, %v609
  %v617 = vadd.f32 %v590, %v609
  %v618 = vadd.f32 %v591, %v609
  %v619 = vadd.f32 %v592, %v609
  %v620 = vadd.f32 %v593, %v609
  %v621 = vadd.f32 %v594, %v609
  %v622 = vadd.f32 %v595, %v609
  %v623 = vadd.f32 %v596, %v609
  %v624 = vadd.f32 %v597, %v609
  %v625 = vadd.f32 %v598, %v609
  %v626 = vadd.f32 %v599, %v609
  %v627 = vadd.f32 %v600, %v609
  %v628 = vadd.f32 %v601, %v609
  %v629 = vadd.f32 %v602, %v609
  %v630 = vadd.f32 %v603, %v609
  %v631 = vadd.f32 %v604, %v609
  %v632 = vadd.f32 %v605, %v609
  %v633 = vadd.f32 %v606, %v609
  %v634 = vadd.f32 %v607, %v609
  %v635 = vadd.f32 %v608, %v609
  %vm636 = vcmask 7168
  %637 = vst.msk [vmem:[%s4] sm:$0xff] %vm636, %v610
  %638 = vst.msk [vmem:[%s4 + $0x8] sm:$0xff] %vm636, %v611
  %639 = vst.msk [vmem:[%s4 + $0x10] sm:$0xff] %vm636, %v612
  %640 = vst.msk [vmem:[%s4 + $0x18] sm:$0xff] %vm636, %v613
  %641 = vst.msk [vmem:[%s4 + $0x20] sm:$0xff] %vm636, %v614
  %642 = vst.msk [vmem:[%s4 + $0x28] sm:$0xff] %vm636, %v615
  %643 = vst.msk [vmem:[%s4 + $0x30] sm:$0xff] %vm636, %v616
  %644 = vst.msk [vmem:[%s4 + $0x38] sm:$0xff] %vm636, %v617
  %645 = vst.msk [vmem:[%s4 + $0x40] sm:$0xff] %vm636, %v618
  %646 = vst.msk [vmem:[%s4 + $0x48] sm:$0xff] %vm636, %v619
  %647 = vst.msk [vmem:[%s4 + $0x50] sm:$0xff] %vm636, %v620
  %648 = vst.msk [vmem:[%s4 + $0x58] sm:$0xff] %vm636, %v621
  %649 = vst.msk [vmem:[%s4 + $0x60] sm:$0xff] %vm636, %v622
  %650 = vst.msk [vmem:[%s4 + $0x68] sm:$0xff] %vm636, %v623
  %651 = vst.msk [vmem:[%s4 + $0x70] sm:$0xff] %vm636, %v624
  %652 = vst.msk [vmem:[%s4 + $0x78] sm:$0xff] %vm636, %v625
  %653 = vst.msk [vmem:[%s4 + $0x80] sm:$0xff] %vm636, %v626
  %654 = vst.msk [vmem:[%s4 + $0x88] sm:$0xff] %vm636, %v627
  %655 = vst.msk [vmem:[%s4 + $0x90] sm:$0xff] %vm636, %v628
  %656 = vst.msk [vmem:[%s4 + $0x98] sm:$0xff] %vm636, %v629
  %657 = vst.msk [vmem:[%s4 + $0xa0] sm:$0xff] %vm636, %v630
  %658 = vst.msk [vmem:[%s4 + $0xa8] sm:$0xff] %vm636, %v631
  %659 = vst.msk [vmem:[%s4 + $0xb0] sm:$0xff] %vm636, %v632
  %660 = vst.msk [vmem:[%s4 + $0xb8] sm:$0xff] %vm636, %v633
  %661 = vst.msk [vmem:[%s4 + $0xc0] sm:$0xff] %vm636, %v634
  %662 = vst.msk [vmem:[%s4 + $0xc8] sm:$0xff] %vm636, %v635
  // Predicated region
  $region18: #{torch_fm_forward.1} parent=0 // pred_check
    _
  $region19: #{torch_fm_forward.1} parent=0 // pred_check_branch
    %664 = sbr.rel (0) target = $region21
  $region20: #{torch_fm_forward.1} parent=0 // pred_region
    _
  $region21: #{torch_fm_forward.1} parent=0 // pred_fallthru
    _
  // Predicated region
  $region22: #{torch_fm_forward.1} parent=0 // pred_check
    _
  $region23: #{torch_fm_forward.1} parent=0 // pred_check_branch
    %666 = sbr.rel (0) target = $region25
  $region24: #{torch_fm_forward.1} parent=0 // pred_region
    _
  $region25: #{torch_fm_forward.1} parent=0 // pred_fallthru
    _

</llo_original>
